<compile_context>
chip_gen: v7x
topology: tpu7x:2x2x1
jax: 0.10.0
libtpu: 0.0.40
codegen_flags: <defaults>
</compile_context>

<pallas_src>
import functools

import jax
import jax.numpy as jnp
from jax.experimental import pallas as pl
from jax.experimental.pallas import tpu as pltpu


def _round_up(x, m):
    return ((x + m - 1) // m) * m


def _choose_tiles(n_nodes):
    """Row tile tm, K tile tk (both multiples of 128) and padded node count."""
    if n_nodes <= 512:
        n_pad = _round_up(n_nodes, 128)
        return n_pad, n_pad, n_pad          # single tile per axis
    tm, tk = 256, 512
    return tm, tk, _round_up(n_nodes, 512)  # tm | n_pad and tk | n_pad


def _full_spec(shape):
    # No grid: one program, whole-array blocks resident in VMEM.
    return pl.BlockSpec(shape, lambda: (0,) * len(shape))


# ---------------------------------------------------------------------------
# Kernel 1:  H = tanh( D^{-1/2} (A+I) Z' + b1 )   (Z' = D^{-1/2} X W1)
#            plus the per-row-tile pooled partial  P_tile · H_tile.
# grid = (row_tiles, k_tiles); K carries the accumulator, rows are parallel.
# ---------------------------------------------------------------------------
def _gcn_h_kernel(adj_ref, zp_ref, dinv_ref, b1_ref, pool_ref,
                  h_ref, ppool_ref, acc_ref):
    k = pl.program_id(1)

    @pl.when(k == 0)
    def _():
        acc_ref[...] = jnp.zeros_like(acc_ref)

    # (A+I)[tm, tk] (bf16)  @  Z'[tk, Hpad] (bf16)  -> f32 accumulate on MXU
    acc_ref[...] += jnp.dot(adj_ref[...], zp_ref[...],
                            preferred_element_type=jnp.float32)

    @pl.when(k == pl.num_programs(1) - 1)
    def _():
        # Fused row-side D^{-1/2}, bias and tanh — all in f32 (v5e-safe).
        h = jnp.tanh(dinv_ref[...] * acc_ref[...] + b1_ref[...])
        h_ref[...] = h.astype(h_ref.dtype)
        # Partial mean-pool contribution of this row tile (small MXU op).
        pooled = jnp.dot(pool_ref[...], h, preferred_element_type=jnp.float32)
        ppool_ref[...] = pooled[None, :, :].astype(ppool_ref.dtype)


# ---------------------------------------------------------------------------
# Kernel 2: sum the per-row-tile pooled partials, then
#           graph_embeddings = tanh( pooled @ W2 + b2 )    (tiny, no grid)
# ---------------------------------------------------------------------------
def _pool_linear_kernel(ppool_ref, w2_ref, b2_ref, g_ref):
    n_tiles = ppool_ref.shape[0]          # static
    pooled = ppool_ref[0]
    for t in range(1, n_tiles):           # small, unrolled cross-tile reduce
        pooled = pooled + ppool_ref[t]
    g = jnp.dot(pooled, w2_ref[...],
                preferred_element_type=jnp.float32) + b2_ref[...]
    g_ref[...] = jnp.tanh(g).astype(g_ref.dtype)


@functools.partial(jax.jit, static_argnames=("num_graphs",))
def stage1_gcn_encoder_forward(x, edge_index, batch, params, *, num_graphs):
    """x: [N, F] f32, edge_index: [2, E] int32 (row0=src, row1=dst),
    batch: [N] int32.  Returns (graph_embeddings, node_embeddings)."""
    n_nodes, in_feat = x.shape
    w1, b1, w2, b2 = params["w1"], params["b1"], params["w2"], params["b2"]
    hidden = w1.shape[1]
    out_feat = w2.shape[1]

    tm, tk, n_pad = _choose_tiles(n_nodes)
    h_pad = _round_up(hidden, 128)
    o_pad = _round_up(out_feat, 128)
    g_pad = _round_up(num_graphs, 8)
    n_row_tiles = n_pad // tm
    n_k_tiles = n_pad // tk

    # ---- glue: A + I (unnormalized; entries are small ints, exact in bf16) ----
    src, dst = edge_index[0], edge_index[1]
    adj = jnp.zeros((n_pad, n_pad), jnp.float32)
    adj = adj.at[dst, src].add(1.0)                       # A[dst, src] += 1
    diag = jnp.arange(n_nodes)
    adj = adj.at[diag, diag].add(1.0)                     # self loops (real nodes)
    deg = jnp.sum(adj, axis=1)                            # in-degree of A + I
    dinv = jnp.where(deg > 0, jax.lax.rsqrt(deg), 0.0)    # [n_pad]
    adj_bf16 = adj.astype(jnp.bfloat16)

    # ---- glue: Z' = D^{-1/2} (X W1), padded lane-dense, streamed in bf16 ----
    x_p = jnp.pad(x, ((0, n_pad - n_nodes), (0, 0)))
    z = (x_p @ w1) * dinv[:, None]                        # [n_pad, hidden] f32
    z_p = jnp.pad(z, ((0, 0), (0, h_pad - hidden))).astype(jnp.bfloat16)

    dinv_2d = dinv[:, None]                               # [n_pad, 1] f32
    b1_2d = jnp.pad(b1, (0, h_pad - hidden)).reshape(1, h_pad)

    # ---- glue: mean-pool matrix P [g_pad, n_pad] (zero cols for padded nodes) ----
    one_hot = (batch[None, :] ==
               jnp.arange(num_graphs, dtype=batch.dtype)[:, None]).astype(jnp.float32)
    counts = jnp.maximum(jnp.sum(one_hot, axis=1, keepdims=True), 1.0)
    pool = jnp.pad(one_hot / counts,
                   ((0, g_pad - num_graphs), (0, n_pad - n_nodes)))

    w2_p = jnp.pad(w2, ((0, h_pad - hidden), (0, o_pad - out_feat)))
    b2_2d = jnp.pad(b2, (0, o_pad - out_feat)).reshape(1, o_pad)

    cost = pl.CostEstimate(
        flops=2 * n_pad * n_pad * h_pad + 2 * n_pad * g_pad * h_pad,
        transcendentals=n_pad * h_pad,
        bytes_accessed=(n_pad * n_pad * 2                   # bf16 A+I stream
                        + n_row_tiles * n_pad * h_pad * 2   # Z' re-read per row tile
                        + n_pad * h_pad * 4                 # H writeback
                        + g_pad * n_pad * 4                 # pool matrix
                        + n_row_tiles * g_pad * h_pad * 4))

    h_full, ppool = pl.pallas_call(
        _gcn_h_kernel,
        out_shape=(
            jax.ShapeDtypeStruct((n_pad, h_pad), jnp.float32),               # H
            jax.ShapeDtypeStruct((n_row_tiles, g_pad, h_pad), jnp.float32),  # pooled partials
        ),
        grid_spec=pltpu.PrefetchScalarGridSpec(
            num_scalar_prefetch=0,
            grid=(n_row_tiles, n_k_tiles),
            in_specs=[
                pl.BlockSpec((tm, tk), lambda i, k: (i, k)),       # (A+I) tile, bf16
                pl.BlockSpec((tk, h_pad), lambda i, k: (k, 0)),    # Z' tile, bf16
                pl.BlockSpec((tm, 1), lambda i, k: (i, 0)),        # D^{-1/2} rows
                pl.BlockSpec((1, h_pad), lambda i, k: (0, 0)),     # b1
                pl.BlockSpec((g_pad, tm), lambda i, k: (0, i)),    # pool columns
            ],
            out_specs=[
                pl.BlockSpec((tm, h_pad), lambda i, k: (i, 0)),
                pl.BlockSpec((1, g_pad, h_pad), lambda i, k: (i, 0, 0)),
            ],
            scratch_shapes=[pltpu.VMEM((tm, h_pad), jnp.float32)],
        ),
        compiler_params=pltpu.CompilerParams(
            dimension_semantics=("parallel", "arbitrary"),
            vmem_limit_bytes=32 * 1024 * 1024),
        cost_estimate=cost,
    )(adj_bf16, z_p, dinv_2d, b1_2d, pool)

    # Cross-row-tile reduction + Linear + tanh fused in one tiny Pallas call.
    g_full = pl.pallas_call(
        _pool_linear_kernel,
        out_shape=jax.ShapeDtypeStruct((g_pad, o_pad), jnp.float32),
        in_specs=[_full_spec((n_row_tiles, g_pad, h_pad)),
                  _full_spec((h_pad, o_pad)),
                  _full_spec((1, o_pad))],
        out_specs=_full_spec((g_pad, o_pad)),
    )(ppool, w2_p, b2_2d)

    graph_emb = g_full[:num_graphs, :out_feat]
    node_emb = h_full[:n_nodes, :hidden]
    return graph_emb, node_emb


def init_params(key, in_feature, hidden_feature, out_feature):
    k1, k2, k3 = jax.random.split(key, 3)
    # GCNConv: glorot-uniform weight [in, hidden], zero bias (PyG default).
    limit1 = jnp.sqrt(6.0 / (in_feature + hidden_feature))
    w1 = jax.random.uniform(k1, (in_feature, hidden_feature), jnp.float32,
                            -limit1, limit1)
    b1 = jnp.zeros((hidden_feature,), jnp.float32)
    # nn.Linear: U(-1/sqrt(fan_in), 1/sqrt(fan_in)) for weight and bias.
    limit2 = 1.0 / jnp.sqrt(jnp.float32(hidden_feature))
    w2 = jax.random.uniform(k2, (hidden_feature, out_feature), jnp.float32,
                            -limit2, limit2)
    b2 = jax.random.uniform(k3, (out_feature,), jnp.float32, -limit2, limit2)
    return {"w1": w1, "b1": b1, "w2": w2, "b2": b2}


# TODO(synk): for large sparse graphs, replace the dense (A+I) stream with a
# CSR neighbor-gather kernel via PrefetchScalarGridSpec (O(E·H) HBM traffic).

if __name__ == "__main__":
    # Small synthetic graph batch: 2 graphs of 8 nodes each (N=16),
    # in_feature=8, hidden_feature=32, out_feature=16.
    in_feature, hidden_feature, out_feature = 8, 32, 16
    nodes_per_graph, num_graphs = 8, 2
    n_nodes = nodes_per_graph * num_graphs

    key = jax.random.PRNGKey(0)
    k_x, k_p = jax.random.split(key)

    x = jax.random.normal(k_x, (n_nodes, in_feature), jnp.float32)

    # bidirectional ring within each graph
    src_list, dst_list = [], []
    for g in range(num_graphs):
        base = g * nodes_per_graph
        for i in range(nodes_per_graph):
            a = base + i
            b = base + (i + 1) % nodes_per_graph
            src_list += [a, b]
            dst_list += [b, a]
    edge_index = jnp.array([src_list, dst_list], dtype=jnp.int32)  # [2, 32]

    batch = jnp.repeat(jnp.arange(num_graphs, dtype=jnp.int32), nodes_per_graph)

    params = init_params(k_p, in_feature, hidden_feature, out_feature)

    graph_emb, node_emb = stage1_gcn_encoder_forward(
        x, edge_index, batch, params, num_graphs=num_graphs
    )
    jax.block_until_ready((graph_emb, node_emb))

    assert graph_emb.shape == (num_graphs, out_feature)
    assert node_emb.shape == (n_nodes, hidden_feature)
    assert bool(jnp.all(jnp.isfinite(graph_emb))) and bool(jnp.all(jnp.isfinite(node_emb)))
    print("KERNEL_OK")
</pallas_src>

<mosaic_0001>
module attributes {stable_mosaic.version = 11 : i64} {
  func.func private @main(%arg0: i32) attributes {dimension_semantics = [#tpu.dimension_semantics<core_parallel>], iteration_bounds = array<i64: 2>, tpu.core_type = #tpu.core_type<sc_scalar_subcore>, window_params = []} {
    return
  }
}

module attributes {stable_mosaic.version = 11 : i64} {
  func.func private @main(%arg0: i32) attributes {dimension_semantics = [#tpu.dimension_semantics<core_parallel>], iteration_bounds = array<i64: 2>, tpu.core_type = #tpu.core_type<sc_scalar_subcore>, window_params = []} {
    return
  }
}

module attributes {stable_mosaic.version = 11 : i64} {
  func.func @_pool_linear_kernel(%arg0: memref<1x8x128xf32, #tpu.memory_space<vmem>>, %arg1: memref<128x128xf32, #tpu.memory_space<vmem>>, %arg2: memref<1x128xf32, #tpu.memory_space<vmem>>, %arg3: memref<8x128xf32, #tpu.memory_space<vmem>>) attributes {dimension_semantics = [], scalar_prefetch = 0 : i64, scratch_operands = 0 : i64, tpu.core_type = #tpu.core_type<tc>} {
    %c0 = arith.constant 0 : index
    %c0_0 = arith.constant 0 : index
    %c0_1 = arith.constant 0 : index
    %0 = vector.load %arg0[%c0, %c0_0, %c0_1] : memref<1x8x128xf32, #tpu.memory_space<vmem>>, vector<1x8x128xf32>
    %1 = vector.shape_cast %0 : vector<1x8x128xf32> to vector<8x128xf32>
    %c0_2 = arith.constant 0 : index
    %c0_3 = arith.constant 0 : index
    %2 = vector.load %arg1[%c0_2, %c0_3] : memref<128x128xf32, #tpu.memory_space<vmem>>, vector<128x128xf32>
    %cst = arith.constant dense<0.000000e+00> : vector<8x128xf32>
    %3 = tpu.matmul %1, %2, %cst {dimension_numbers = #tpu.dot_dimension_numbers<[1], [0], [0], [1], [0, 0, 1, 1], [], []>} : vector<8x128xf32>, vector<128x128xf32>, vector<8x128xf32> -> vector<8x128xf32>
    %c0_4 = arith.constant 0 : index
    %c0_5 = arith.constant 0 : index
    %4 = vector.load %arg2[%c0_4, %c0_5] : memref<1x128xf32, #tpu.memory_space<vmem>>, vector<1x128xf32>
    %5 = vector.broadcast %4 : vector<1x128xf32> to vector<8x128xf32>
    %6 = arith.addf %3, %5 : vector<8x128xf32>
    %7 = math.tanh %6 : vector<8x128xf32>
    %c0_6 = arith.constant 0 : index
    %c0_7 = arith.constant 0 : index
    %8 = vector.load %arg3[%c0_6, %c0_7] : memref<8x128xf32, #tpu.memory_space<vmem>>, vector<8x128xf32>
    tpu.vector_store %arg3[%c0_6, %c0_7], %7 {strides = array<i32>} : memref<8x128xf32, #tpu.memory_space<vmem>>, vector<8x128xf32>,
    return
  }
}

module attributes {stable_mosaic.version = 11 : i64} {
  func.func @_gcn_h_kernel(%arg0: i32, %arg1: i32, %arg2: memref<128x128xbf16, #tpu.memory_space<vmem>>, %arg3: memref<128x128xbf16, #tpu.memory_space<vmem>>, %arg4: memref<128x1xf32, #tpu.memory_space<vmem>>, %arg5: memref<1x128xf32, #tpu.memory_space<vmem>>, %arg6: memref<8x128xf32, #tpu.memory_space<vmem>>, %arg7: memref<128x128xf32, #tpu.memory_space<vmem>>, %arg8: memref<1x8x128xf32, #tpu.memory_space<vmem>>, %arg9: memref<128x128xf32, #tpu.memory_space<vmem>>) attributes {dimension_semantics = [#tpu.dimension_semantics<parallel>, #tpu.dimension_semantics<arbitrary>], iteration_bounds = array<i64: 1, 1>, scalar_prefetch = 0 : i64, scratch_operands = 1 : i64, tpu.core_type = #tpu.core_type<tc>, window_params = [{transform_indices = @transform_0, window_bounds = array<i64: 128, 128>}, {transform_indices = @transform_1, window_bounds = array<i64: 128, 128>}, {transform_indices = @transform_2, window_bounds = array<i64: 128, 1>}, {pipeline_mode = #tpu.pipeline_mode<synchronous>, transform_indices = @transform_3, window_bounds = array<i64: 1, 128>}, {transform_indices = @transform_4, window_bounds = array<i64: 8, 128>}, {transform_indices = @transform_5, window_bounds = array<i64: 128, 128>}, {transform_indices = @transform_6, window_bounds = array<i64: 1, 8, 128>}]} {
    %c0_i32 = arith.constant 0 : i32
    %0 = arith.cmpi eq, %arg1, %c0_i32 : i32
    %1 = arith.extui %0 : i1 to i32
    %c0_i32_0 = arith.constant 0 : i32
    %2 = arith.cmpi ne, %1, %c0_i32_0 : i32
    scf.if %2 {
      %cst_10 = arith.constant 0.000000e+00 : f32
      %12 = vector.broadcast %cst_10 : f32 to vector<128x128xf32>
      %c0_11 = arith.constant 0 : index
      %c0_12 = arith.constant 0 : index
      %13 = vector.load %arg9[%c0_11, %c0_12] : memref<128x128xf32, #tpu.memory_space<vmem>>, vector<128x128xf32>
      tpu.vector_store %arg9[%c0_11, %c0_12], %12 {strides = array<i32>} : memref<128x128xf32, #tpu.memory_space<vmem>>, vector<128x128xf32>,
    } else {
    }
    %c0 = arith.constant 0 : index
    %c0_1 = arith.constant 0 : index
    %3 = vector.load %arg9[%c0, %c0_1] : memref<128x128xf32, #tpu.memory_space<vmem>>, vector<128x128xf32>
    %c0_2 = arith.constant 0 : index
    %c0_3 = arith.constant 0 : index
    %4 = vector.load %arg2[%c0_2, %c0_3] : memref<128x128xbf16, #tpu.memory_space<vmem>>, vector<128x128xbf16>
    %c0_4 = arith.constant 0 : index
    %c0_5 = arith.constant 0 : index
    %5 = vector.load %arg3[%c0_4, %c0_5] : memref<128x128xbf16, #tpu.memory_space<vmem>>, vector<128x128xbf16>
    %cst = arith.constant dense<0.000000e+00> : vector<128x128xf32>
    %6 = tpu.matmul %4, %5, %cst {dimension_numbers = #tpu.dot_dimension_numbers<[1], [0], [0], [1], [0, 0, 1, 1], [], []>} : vector<128x128xbf16>, vector<128x128xbf16>, vector<128x128xf32> -> vector<128x128xf32>
    %7 = arith.addf %3, %6 : vector<128x128xf32>
    %c0_6 = arith.constant 0 : index
    %c0_7 = arith.constant 0 : index
    %8 = vector.load %arg9[%c0_6, %c0_7] : memref<128x128xf32, #tpu.memory_space<vmem>>, vector<128x128xf32>
    tpu.vector_store %arg9[%c0_6, %c0_7], %7 {strides = array<i32>} : memref<128x128xf32, #tpu.memory_space<vmem>>, vector<128x128xf32>,
    %c0_i32_8 = arith.constant 0 : i32
    %9 = arith.cmpi eq, %arg1, %c0_i32_8 : i32
    %10 = arith.extui %9 : i1 to i32
    %c0_i32_9 = arith.constant 0 : i32
    %11 = arith.cmpi ne, %10, %c0_i32_9 : i32
    scf.if %11 {
      %c0_10 = arith.constant 0 : index
      %c0_11 = arith.constant 0 : index
      %12 = vector.load %arg4[%c0_10, %c0_11] : memref<128x1xf32, #tpu.memory_space<vmem>>, vector<128x1xf32>
      %c0_12 = arith.constant 0 : index
      %c0_13 = arith.constant 0 : index
      %13 = vector.load %arg9[%c0_12, %c0_13] : memref<128x128xf32, #tpu.memory_space<vmem>>, vector<128x128xf32>
      %14 = vector.broadcast %12 : vector<128x1xf32> to vector<128x128xf32>
      %15 = arith.mulf %14, %13 : vector<128x128xf32>
      %c0_14 = arith.constant 0 : index
      %c0_15 = arith.constant 0 : index
      %16 = vector.load %arg5[%c0_14, %c0_15] : memref<1x128xf32, #tpu.memory_space<vmem>>, vector<1x128xf32>
      %17 = vector.broadcast %16 : vector<1x128xf32> to vector<128x128xf32>
      %18 = arith.addf %15, %17 : vector<128x128xf32>
      %19 = math.tanh %18 : vector<128x128xf32>
      %c0_16 = arith.constant 0 : index
      %c0_17 = arith.constant 0 : index
      %20 = vector.load %arg7[%c0_16, %c0_17] : memref<128x128xf32, #tpu.memory_space<vmem>>, vector<128x128xf32>
      tpu.vector_store %arg7[%c0_16, %c0_17], %19 {strides = array<i32>} : memref<128x128xf32, #tpu.memory_space<vmem>>, vector<128x128xf32>,
      %c0_18 = arith.constant 0 : index
      %c0_19 = arith.constant 0 : index
      %21 = vector.load %arg6[%c0_18, %c0_19] : memref<8x128xf32, #tpu.memory_space<vmem>>, vector<8x128xf32>
      %cst_20 = arith.constant dense<0.000000e+00> : vector<8x128xf32>
      %22 = tpu.matmul %21, %19, %cst_20 {dimension_numbers = #tpu.dot_dimension_numbers<[1], [0], [0], [1], [0, 0, 1, 1], [], []>} : vector<8x128xf32>, vector<128x128xf32>, vector<8x128xf32> -> vector<8x128xf32>
      %23 = vector.shape_cast %22 : vector<8x128xf32> to vector<1x8x128xf32>
      %c0_21 = arith.constant 0 : index
      %c0_22 = arith.constant 0 : index
      %c0_23 = arith.constant 0 : index
      %24 = vector.load %arg8[%c0_21, %c0_22, %c0_23] : memref<1x8x128xf32, #tpu.memory_space<vmem>>, vector<1x8x128xf32>
      tpu.vector_store %arg8[%c0_21, %c0_22, %c0_23], %23 {strides = array<i32>} : memref<1x8x128xf32, #tpu.memory_space<vmem>>, vector<1x8x128xf32>,
    } else {
    }
    return
  }
  func.func @transform_0(%arg0: i32, %arg1: i32) -> (i32, i32) {
    %c0_i32 = arith.constant 0 : i32
    return %arg0, %arg1 : i32, i32
  }
  func.func @transform_1(%arg0: i32, %arg1: i32) -> (i32, i32) {
    %c0_i32 = arith.constant 0 : i32
    %c0_i32_0 = arith.constant 0 : i32
    return %arg1, %c0_i32 : i32, i32
  }
  func.func @transform_2(%arg0: i32, %arg1: i32) -> (i32, i32) {
    %c0_i32 = arith.constant 0 : i32
    %c0_i32_0 = arith.constant 0 : i32
    return %arg0, %c0_i32 : i32, i32
  }
  func.func @transform_3(%arg0: i32, %arg1: i32) -> (i32, i32) {
    %c0_i32 = arith.constant 0 : i32
    %c0_i32_0 = arith.constant 0 : i32
    %c0_i32_1 = arith.constant 0 : i32
    return %c0_i32, %c0_i32_0 : i32, i32
  }
  func.func @transform_4(%arg0: i32, %arg1: i32) -> (i32, i32) {
    %c0_i32 = arith.constant 0 : i32
    %c0_i32_0 = arith.constant 0 : i32
    return %c0_i32, %arg0 : i32, i32
  }
  func.func @transform_5(%arg0: i32, %arg1: i32) -> (i32, i32) {
    %c0_i32 = arith.constant 0 : i32
    %c0_i32_0 = arith.constant 0 : i32
    return %arg0, %c0_i32 : i32, i32
  }
  func.func @transform_6(%arg0: i32, %arg1: i32) -> (i32, i32, i32) {
    %c0_i32 = arith.constant 0 : i32
    %c0_i32_0 = arith.constant 0 : i32
    %c0_i32_1 = arith.constant 0 : i32
    return %arg0, %c0_i32, %c0_i32_0 : i32, i32, i32
  }
}

</mosaic_0001>

<llo_original>
// kernel: stage1_gcn_encoder_forward.3
$region0: #{stage1_gcn_encoder_forward.3}
  #allocation0 [shape = 'u32[]', space=smem, size = 0x4, offset = 0x4, fixed_abs, tag = 'smem constant byte address 0x4 - core index']
  #allocation1 [shape = 'u32[144,128]{1,0:T(1,128)}', space=vmem, size = 0x12000, scoped, tag = 'internal scratch']
  %s0 = inlined_call_operand.vmem [shape: f32[1,8,128], index: 0, kind: input, shape index: {}]
  %s1 = inlined_call_operand.vmem [shape: f32[128,128], index: 1, kind: input, shape index: {}]
  %s2 = inlined_call_operand.vmem [shape: f32[1,128], index: 2, kind: input, shape index: {}]
  %s3 = inlined_call_operand.vmem [shape: f32[8,128], index: 3, kind: output, shape index: {}]
  %s4 = sld [smem:[#allocation0]]
  $region22: #{stage1_gcn_encoder_forward.3} parent=0
    _
  %s6 = ssub.s32 1, %s4
  %s7 = scalar_select 0, %s6, %s4
  // Predicated region
  $region2: #{stage1_gcn_encoder_forward.3} parent=0 // pred_check
    _
  $region3: #{stage1_gcn_encoder_forward.3} parent=0 // pred_check_branch
    %9 = sbr.rel (0) target = $region5
  $region4: #{stage1_gcn_encoder_forward.3} parent=0 // pred_region
    _
  $region5: #{stage1_gcn_encoder_forward.3} parent=0 // pred_fallthru
    _
  // Predicated region
  $region6: #{stage1_gcn_encoder_forward.3} parent=0 // pred_check
    _
  $region7: #{stage1_gcn_encoder_forward.3} parent=0 // pred_check_branch
    %11 = sbr.rel (0) target = $region9
  $region8: #{stage1_gcn_encoder_forward.3} parent=0 // pred_region
    _
  $region9: #{stage1_gcn_encoder_forward.3} parent=0 // pred_fallthru
    _
  // Predicated region
  $region10: #{stage1_gcn_encoder_forward.3} parent=0 // pred_check
    _
  $region11: #{stage1_gcn_encoder_forward.3} parent=0 // pred_check_branch
    %13 = sbr.rel (0) target = $region13
  $region12: #{stage1_gcn_encoder_forward.3} parent=0 // pred_region
    _
  $region13: #{stage1_gcn_encoder_forward.3} parent=0 // pred_fallthru
    _
  %v14 = vld [vmem:[%s0] sm:$0xff]
  %v15 = vld [vmem:[%s1] sm:$0xff]
  %v16 = vld [vmem:[%s1 + $0x8] sm:$0xff]
  %v17 = vld [vmem:[%s1 + $0x10] sm:$0xff]
  %v18 = vld [vmem:[%s1 + $0x18] sm:$0xff]
  %v19 = vld [vmem:[%s1 + $0x20] sm:$0xff]
  %v20 = vld [vmem:[%s1 + $0x28] sm:$0xff]
  %v21 = vld [vmem:[%s1 + $0x30] sm:$0xff]
  %v22 = vld [vmem:[%s1 + $0x38] sm:$0xff]
  %v23 = vld [vmem:[%s1 + $0x40] sm:$0xff]
  %v24 = vld [vmem:[%s1 + $0x48] sm:$0xff]
  %v25 = vld [vmem:[%s1 + $0x50] sm:$0xff]
  %v26 = vld [vmem:[%s1 + $0x58] sm:$0xff]
  %v27 = vld [vmem:[%s1 + $0x60] sm:$0xff]
  %v28 = vld [vmem:[%s1 + $0x68] sm:$0xff]
  %v29 = vld [vmem:[%s1 + $0x70] sm:$0xff]
  %v30 = vld [vmem:[%s1 + $0x78] sm:$0xff]
  %v31 = vld [vmem:[%s2] sm:$0x1]
  %v33 = vlaneseq
  %v34 = vshrl.u32 %v33, 7
  %v35 = vsub.s32 0, %v34
  %v36 = vrot.slane %v31, %v35
  %38 = vmatprep.subr.mxu0 0.0
  %39 = vmatpush1.msra.mxu0 %v15
  %40 = vmatprep.subr.mxu0 0.0
  %41 = vmatpush1.msra.mxu0 %v16
  %42 = vmatprep.subr.mxu0 0.0
  %43 = vmatpush1.msra.mxu0 %v17
  %44 = vmatprep.subr.mxu0 0.0
  %45 = vmatpush1.msra.mxu0 %v18
  %46 = vmatprep.subr.mxu0 0.0
  %47 = vmatpush1.msra.mxu0 %v19
  %48 = vmatprep.subr.mxu0 0.0
  %49 = vmatpush1.msra.mxu0 %v20
  %50 = vmatprep.subr.mxu0 0.0
  %51 = vmatpush1.msra.mxu0 %v21
  %52 = vmatprep.subr.mxu0 0.0
  %53 = vmatpush1.msra.mxu0 %v22
  %54 = vmatprep.subr.mxu0 0.0
  %55 = vmatpush1.msra.mxu0 %v23
  %56 = vmatprep.subr.mxu0 0.0
  %57 = vmatpush1.msra.mxu0 %v24
  %58 = vmatprep.subr.mxu0 0.0
  %59 = vmatpush1.msra.mxu0 %v25
  %60 = vmatprep.subr.mxu0 0.0
  %61 = vmatpush1.msra.mxu0 %v26
  %62 = vmatprep.subr.mxu0 0.0
  %63 = vmatpush1.msra.mxu0 %v27
  %64 = vmatprep.subr.mxu0 0.0
  %65 = vmatpush1.msra.mxu0 %v28
  %66 = vmatprep.subr.mxu0 0.0
  %67 = vmatpush1.msra.mxu0 %v29
  %68 = vmatprep.subr.mxu0 0.0
  %69 = vmatpush1.msra.mxu0 %v30
  %70 = vmatprep.subr.mxu0 0.0
  %71 = vmatpush1.msra.mxu0 0.0
  %72 = vmatprep.subr.mxu0 0.0
  %73 = vmatpush1.msra.mxu0 0.0
  %74 = vmatprep.subr.mxu0 0.0
  %75 = vmatpush1.msra.mxu0 0.0
  %76 = vmatprep.subr.mxu0 0.0
  %77 = vmatpush1.msra.mxu0 0.0
  %78 = vmatprep.subr.mxu0 0.0
  %79 = vmatpush1.msra.mxu0 0.0
  %80 = vmatprep.subr.mxu0 0.0
  %81 = vmatpush1.msra.mxu0 0.0
  %82 = vmatprep.subr.mxu0 0.0
  %83 = vmatpush1.msra.mxu0 0.0
  %84 = vmatprep.subr.mxu0 0.0
  %85 = vmatpush1.msra.mxu0 0.0
  %86 = vmatprep.subr.mxu0 0.0
  %87 = vmatpush1.msra.mxu0 0.0
  %88 = vmatprep.subr.mxu0 0.0
  %89 = vmatpush1.msra.mxu0 0.0
  %90 = vmatprep.subr.mxu0 0.0
  %91 = vmatpush1.msra.mxu0 0.0
  %92 = vmatprep.subr.mxu0 0.0
  %93 = vmatpush1.msra.mxu0 0.0
  %94 = vmatprep.subr.mxu0 0.0
  %95 = vmatpush1.msra.mxu0 0.0
  %96 = vmatprep.subr.mxu0 0.0
  %97 = vmatpush1.msra.mxu0 0.0
  %98 = vmatprep.subr.mxu0 0.0
  %99 = vmatpush1.msra.mxu0 0.0
  %100 = vmatprep.subr.mxu0 0.0
  %101 = vmatpush1.msra.mxu0 0.0
  %102 = vmatprep.mubr.f32.mxu0 0.0
  %103 = vmatmul.mubr.f32.gmra.mrb[0].mxu0 %v14
  %v104 = vpop.f32.mrb[0].mxu0
  %v105 = vadd.f32 %v36, %v104
  %v106 = vpop.f32.mrb[0].mxu0
  %107 = vdwg.mxu0
  %v108 = vtanh.pop %v105
  %109 = vst [vmem:[%s3] sm:$0xff] %v108
  // Predicated region
  $region14: #{stage1_gcn_encoder_forward.3} parent=0 // pred_check
    _
  $region15: #{stage1_gcn_encoder_forward.3} parent=0 // pred_check_branch
    %111 = sbr.rel (0) target = $region17
  $region16: #{stage1_gcn_encoder_forward.3} parent=0 // pred_region
    _
  $region17: #{stage1_gcn_encoder_forward.3} parent=0 // pred_fallthru
    _
  // Predicated region
  $region18: #{stage1_gcn_encoder_forward.3} parent=0 // pred_check
    _
  $region19: #{stage1_gcn_encoder_forward.3} parent=0 // pred_check_branch
    %113 = sbr.rel (0) target = $region21
  $region20: #{stage1_gcn_encoder_forward.3} parent=0 // pred_region
    _
  $region21: #{stage1_gcn_encoder_forward.3} parent=0 // pred_fallthru
    _

// kernel: stage1_gcn_encoder_forward.2
$region0: #{stage1_gcn_encoder_forward.2}
  #allocation0 [shape = 'u32[]', space=smem, size = 0x4, offset = 0x4, fixed_abs, tag = 'smem constant byte address 0x4 - core index']
  #allocation1 [shape = 'u32[144,128]{1,0:T(1,128)}', space=vmem, size = 0x12000, scoped, tag = 'internal scratch']
  #allocation2 [shape = 'f32[128,128]{1,0:T(8,128)}', space=vmem, size = 0x10000, scoped, tag = 'scratch operand']
  %s0 = inlined_call_operand.vmem [shape: bf16[128,128], index: 0, kind: input, shape index: {}]
  %s1 = inlined_call_operand.vmem [shape: bf16[128,128], index: 1, kind: input, shape index: {}]
  %s2 = inlined_call_operand.vmem [shape: f32[128,1], index: 2, kind: input, shape index: {}]
  %s3 = inlined_call_operand.vmem [shape: f32[1,128], index: 3, kind: input, shape index: {}]
  %s4 = inlined_call_operand.vmem [shape: f32[8,128], index: 4, kind: input, shape index: {}]
  %s5 = inlined_call_operand.vmem [shape: f32[128,128], index: 5, kind: output, shape index: {0}]
  %s6 = inlined_call_operand.vmem [shape: f32[1,8,128], index: 6, kind: output, shape index: {1}]
  %7 = xla_tuple %s5, %s6
  %s8 = sld [smem:[#allocation0]]
  $region46: #{stage1_gcn_encoder_forward.2} parent=0
    _
  %s10 = ssub.s32 1, %s8
  %s11 = scalar_select 0, %s10, %s8
  // Predicated region
  $region2: #{stage1_gcn_encoder_forward.2} parent=0 // pred_check
    _
  $region3: #{stage1_gcn_encoder_forward.2} parent=0 // pred_check_branch
    %13 = sbr.rel (0) target = $region5
  $region4: #{stage1_gcn_encoder_forward.2} parent=0 // pred_region
    _
  $region5: #{stage1_gcn_encoder_forward.2} parent=0 // pred_fallthru
    _
  // Predicated region
  $region6: #{stage1_gcn_encoder_forward.2} parent=0 // pred_check
    _
  $region7: #{stage1_gcn_encoder_forward.2} parent=0 // pred_check_branch
    %15 = sbr.rel (0) target = $region9
  $region8: #{stage1_gcn_encoder_forward.2} parent=0 // pred_region
    _
  $region9: #{stage1_gcn_encoder_forward.2} parent=0 // pred_fallthru
    _
  // Predicated region
  $region10: #{stage1_gcn_encoder_forward.2} parent=0 // pred_check
    _
  $region11: #{stage1_gcn_encoder_forward.2} parent=0 // pred_check_branch
    %17 = sbr.rel (0) target = $region13
  $region12: #{stage1_gcn_encoder_forward.2} parent=0 // pred_region
    _
  $region13: #{stage1_gcn_encoder_forward.2} parent=0 // pred_fallthru
    _
  // Predicated region
  $region14: #{stage1_gcn_encoder_forward.2} parent=0 // pred_check
    _
  $region15: #{stage1_gcn_encoder_forward.2} parent=0 // pred_check_branch
    %19 = sbr.rel (0) target = $region17
  $region16: #{stage1_gcn_encoder_forward.2} parent=0 // pred_region
    _
  $region17: #{stage1_gcn_encoder_forward.2} parent=0 // pred_fallthru
    _
  // Predicated region
  $region18: #{stage1_gcn_encoder_forward.2} parent=0 // pred_check
    _
  $region19: #{stage1_gcn_encoder_forward.2} parent=0 // pred_check_branch
    %21 = sbr.rel (0) target = $region21
  $region20: #{stage1_gcn_encoder_forward.2} parent=0 // pred_region
    _
  $region21: #{stage1_gcn_encoder_forward.2} parent=0 // pred_fallthru
    _
  %p23 = scmp.eq.s32.totalorder 0, 0
  // Predicated region
  $region22: #{stage1_gcn_encoder_forward.2} parent=0 // pred_check
    %p24 = pneg %p23
  $region23: #{stage1_gcn_encoder_forward.2} parent=0 // pred_check_branch
    %26 = sbr.rel (%p24) target = $region25
  $region24: #{stage1_gcn_encoder_forward.2} parent=0 // pred_region
    %27 = vst [vmem:[#allocation2] sm:$0xff] 0.0
    %28 = vst [vmem:[#allocation2 + $0x8] sm:$0xff] 0.0
    %29 = vst [vmem:[#allocation2 + $0x10] sm:$0xff] 0.0
    %30 = vst [vmem:[#allocation2 + $0x18] sm:$0xff] 0.0
    %31 = vst [vmem:[#allocation2 + $0x20] sm:$0xff] 0.0
    %32 = vst [vmem:[#allocation2 + $0x28] sm:$0xff] 0.0
    %33 = vst [vmem:[#allocation2 + $0x30] sm:$0xff] 0.0
    %34 = vst [vmem:[#allocation2 + $0x38] sm:$0xff] 0.0
    %35 = vst [vmem:[#allocation2 + $0x40] sm:$0xff] 0.0
    %36 = vst [vmem:[#allocation2 + $0x48] sm:$0xff] 0.0
    %37 = vst [vmem:[#allocation2 + $0x50] sm:$0xff] 0.0
    %38 = vst [vmem:[#allocation2 + $0x58] sm:$0xff] 0.0
    %39 = vst [vmem:[#allocation2 + $0x60] sm:$0xff] 0.0
    %40 = vst [vmem:[#allocation2 + $0x68] sm:$0xff] 0.0
    %41 = vst [vmem:[#allocation2 + $0x70] sm:$0xff] 0.0
    %42 = vst [vmem:[#allocation2 + $0x78] sm:$0xff] 0.0
  $region25: #{stage1_gcn_encoder_forward.2} parent=0 // pred_fallthru
    _
  %v43 = vld [vmem:[#allocation2] sm:$0xff]
  %v44 = vld [vmem:[#allocation2 + $0x8] sm:$0xff]
  %v45 = vld [vmem:[#allocation2 + $0x10] sm:$0xff]
  %v46 = vld [vmem:[#allocation2 + $0x18] sm:$0xff]
  %v47 = vld [vmem:[#allocation2 + $0x20] sm:$0xff]
  %v48 = vld [vmem:[#allocation2 + $0x28] sm:$0xff]
  %v49 = vld [vmem:[#allocation2 + $0x30] sm:$0xff]
  %v50 = vld [vmem:[#allocation2 + $0x38] sm:$0xff]
  %v51 = vld [vmem:[#allocation2 + $0x40] sm:$0xff]
  %v52 = vld [vmem:[#allocation2 + $0x48] sm:$0xff]
  %v53 = vld [vmem:[#allocation2 + $0x50] sm:$0xff]
  %v54 = vld [vmem:[#allocation2 + $0x58] sm:$0xff]
  %v55 = vld [vmem:[#allocation2 + $0x60] sm:$0xff]
  %v56 = vld [vmem:[#allocation2 + $0x68] sm:$0xff]
  %v57 = vld [vmem:[#allocation2 + $0x70] sm:$0xff]
  %v58 = vld [vmem:[#allocation2 + $0x78] sm:$0xff]
  %v59 = vld [vmem:[%s0] sm:$0xf]
  %v60 = vld [vmem:[%s0 + $0x4] sm:$0xf]
  %v61 = vld [vmem:[%s0 + $0x8] sm:$0xf]
  %v62 = vld [vmem:[%s0 + $0xc] sm:$0xf]
  %v63 = vld [vmem:[%s0 + $0x10] sm:$0xf]
  %v64 = vld [vmem:[%s0 + $0x14] sm:$0xf]
  %v65 = vld [vmem:[%s0 + $0x18] sm:$0xf]
  %v66 = vld [vmem:[%s0 + $0x1c] sm:$0xf]
  %v67 = vld [vmem:[%s0 + $0x20] sm:$0xf]
  %v68 = vld [vmem:[%s0 + $0x24] sm:$0xf]
  %v69 = vld [vmem:[%s0 + $0x28] sm:$0xf]
  %v70 = vld [vmem:[%s0 + $0x2c] sm:$0xf]
  %v71 = vld [vmem:[%s0 + $0x30] sm:$0xf]
  %v72 = vld [vmem:[%s0 + $0x34] sm:$0xf]
  %v73 = vld [vmem:[%s0 + $0x38] sm:$0xf]
  %v74 = vld [vmem:[%s0 + $0x3c] sm:$0xf]
  %v75 = vld [vmem:[%s1] sm:$0xf]
  %v76 = vld [vmem:[%s1 + $0x4] sm:$0xf]
  %v77 = vld [vmem:[%s1 + $0x8] sm:$0xf]
  %v78 = vld [vmem:[%s1 + $0xc] sm:$0xf]
  %v79 = vld [vmem:[%s1 + $0x10] sm:$0xf]
  %v80 = vld [vmem:[%s1 + $0x14] sm:$0xf]
  %v81 = vld [vmem:[%s1 + $0x18] sm:$0xf]
  %v82 = vld [vmem:[%s1 + $0x1c] sm:$0xf]
  %v83 = vld [vmem:[%s1 + $0x20] sm:$0xf]
  %v84 = vld [vmem:[%s1 + $0x24] sm:$0xf]
  %v85 = vld [vmem:[%s1 + $0x28] sm:$0xf]
  %v86 = vld [vmem:[%s1 + $0x2c] sm:$0xf]
  %v87 = vld [vmem:[%s1 + $0x30] sm:$0xf]
  %v88 = vld [vmem:[%s1 + $0x34] sm:$0xf]
  %v89 = vld [vmem:[%s1 + $0x38] sm:$0xf]
  %v90 = vld [vmem:[%s1 + $0x3c] sm:$0xf]
  %v107 = vunpack.c.l.b16 %v59
  %v108 = vunpack.c.l.b16 %v60
  %v109 = vunpack.c.l.b16 %v61
  %v110 = vunpack.c.l.b16 %v62
  %v111 = vunpack.c.l.b16 %v63
  %v112 = vunpack.c.l.b16 %v64
  %v113 = vunpack.c.l.b16 %v65
  %v114 = vunpack.c.l.b16 %v66
  %v115 = vunpack.c.l.b16 %v67
  %v116 = vunpack.c.l.b16 %v68
  %v117 = vunpack.c.l.b16 %v69
  %v118 = vunpack.c.l.b16 %v70
  %v119 = vunpack.c.l.b16 %v71
  %v120 = vunpack.c.l.b16 %v72
  %v121 = vunpack.c.l.b16 %v73
  %v122 = vunpack.c.l.b16 %v74
  %v123 = vpack.c.b16 %v108, %v107
  %v124 = vpack.c.b16 %v110, %v109
  %v125 = vpack.c.b16 %v112, %v111
  %v126 = vpack.c.b16 %v114, %v113
  %v127 = vpack.c.b16 %v116, %v115
  %v128 = vpack.c.b16 %v118, %v117
  %v129 = vpack.c.b16 %v120, %v119
  %v130 = vpack.c.b16 %v122, %v121
  %v155 = vunpack.c.l.b16 %v75
  %v156 = vunpack.c.l.b16 %v76
  %v157 = vunpack.c.l.b16 %v77
  %v158 = vunpack.c.l.b16 %v78
  %v159 = vunpack.c.l.b16 %v79
  %v160 = vunpack.c.l.b16 %v80
  %v161 = vunpack.c.l.b16 %v81
  %v162 = vunpack.c.l.b16 %v82
  %v163 = vunpack.c.l.b16 %v83
  %v164 = vunpack.c.l.b16 %v84
  %v165 = vunpack.c.l.b16 %v85
  %v166 = vunpack.c.l.b16 %v86
  %v167 = vunpack.c.l.b16 %v87
  %v168 = vunpack.c.l.b16 %v88
  %v169 = vunpack.c.l.b16 %v89
  %v170 = vunpack.c.l.b16 %v90
  %v171 = vpack.c.b16 %v156, %v155
  %v172 = vpack.c.b16 %v158, %v157
  %v173 = vpack.c.b16 %v160, %v159
  %v174 = vpack.c.b16 %v162, %v161
  %v175 = vpack.c.b16 %v164, %v163
  %v176 = vpack.c.b16 %v166, %v165
  %v177 = vpack.c.b16 %v168, %v167
  %v178 = vpack.c.b16 %v170, %v169
  %187 = vmatprep.subr.bf16.mxu0 0
  %188 = vmatpush1.bf16.msra.mxu0 %v171
  %189 = vmatprep.subr.bf16.mxu0 0
  %190 = vmatpush1.bf16.msra.mxu0 %v172
  %191 = vmatprep.subr.bf16.mxu0 0
  %192 = vmatpush1.bf16.msra.mxu0 %v173
  %193 = vmatprep.subr.bf16.mxu0 0
  %194 = vmatpush1.bf16.msra.mxu0 %v174
  %195 = vmatprep.subr.bf16.mxu0 0
  %196 = vmatpush1.bf16.msra.mxu0 %v175
  %197 = vmatprep.subr.bf16.mxu0 0
  %198 = vmatpush1.bf16.msra.mxu0 %v176
  %199 = vmatprep.subr.bf16.mxu0 0
  %200 = vmatpush1.bf16.msra.mxu0 %v177
  %201 = vmatprep.subr.bf16.mxu0 0
  %202 = vmatpush1.bf16.msra.mxu0 %v178
  %203 = vmatprep.subr.bf16.mxu0 0
  %204 = vmatpush1.bf16.msra.mxu0 0
  %205 = vmatprep.subr.bf16.mxu0 0
  %206 = vmatpush1.bf16.msra.mxu0 0
  %207 = vmatprep.subr.bf16.mxu0 0
  %208 = vmatpush1.bf16.msra.mxu0 0
  %209 = vmatprep.subr.bf16.mxu0 0
  %210 = vmatpush1.bf16.msra.mxu0 0
  %211 = vmatprep.subr.bf16.mxu0 0
  %212 = vmatpush1.bf16.msra.mxu0 0
  %213 = vmatprep.subr.bf16.mxu0 0
  %214 = vmatpush1.bf16.msra.mxu0 0
  %215 = vmatprep.subr.bf16.mxu0 0
  %216 = vmatpush1.bf16.msra.mxu0 0
  %217 = vmatprep.subr.bf16.mxu0 0
  %218 = vmatpush1.bf16.msra.mxu0 0
  %219 = vmatprep.mubr.bf16.mxu0 0
  %220 = vmatmul.mubr.bf16.gmra.mrb[0].mxu0 %v123
  %v221 = vpop.f32.mrb[0].mxu0
  %v222 = vadd.f32 0.0, %v221
  %v223 = vpop.f32.mrb[0].mxu0
  %v224 = vpop.f32.mrb[0].mxu0
  %v225 = vadd.f32 0.0, %v224
  %v226 = vpop.f32.mrb[0].mxu0
  %227 = vmatprep.mubr.bf16.mxu0 0
  %228 = vmatmul.mubr.bf16.gmra.mrb[0].mxu0 %v124
  %v229 = vpop.f32.mrb[0].mxu0
  %v230 = vadd.f32 0.0, %v229
  %v231 = vpop.f32.mrb[0].mxu0
  %v232 = vpop.f32.mrb[0].mxu0
  %v233 = vadd.f32 0.0, %v232
  %v234 = vpop.f32.mrb[0].mxu0
  %235 = vmatprep.mubr.bf16.mxu0 0
  %236 = vmatmul.mubr.bf16.gmra.mrb[0].mxu0 %v125
  %v237 = vpop.f32.mrb[0].mxu0
  %v238 = vadd.f32 0.0, %v237
  %v239 = vpop.f32.mrb[0].mxu0
  %v240 = vpop.f32.mrb[0].mxu0
  %v241 = vadd.f32 0.0, %v240
  %v242 = vpop.f32.mrb[0].mxu0
  %243 = vmatprep.mubr.bf16.mxu0 0
  %244 = vmatmul.mubr.bf16.gmra.mrb[0].mxu0 %v126
  %v245 = vpop.f32.mrb[0].mxu0
  %v246 = vadd.f32 0.0, %v245
  %v247 = vpop.f32.mrb[0].mxu0
  %v248 = vpop.f32.mrb[0].mxu0
  %v249 = vadd.f32 0.0, %v248
  %v250 = vpop.f32.mrb[0].mxu0
  %251 = vmatprep.mubr.bf16.mxu0 0
  %252 = vmatmul.mubr.bf16.gmra.mrb[0].mxu0 %v127
  %v253 = vpop.f32.mrb[0].mxu0
  %v254 = vadd.f32 0.0, %v253
  %v255 = vpop.f32.mrb[0].mxu0
  %v256 = vpop.f32.mrb[0].mxu0
  %v257 = vadd.f32 0.0, %v256
  %v258 = vpop.f32.mrb[0].mxu0
  %259 = vmatprep.mubr.bf16.mxu0 0
  %260 = vmatmul.mubr.bf16.gmra.mrb[0].mxu0 %v128
  %v261 = vpop.f32.mrb[0].mxu0
  %v262 = vadd.f32 0.0, %v261
  %v263 = vpop.f32.mrb[0].mxu0
  %v264 = vpop.f32.mrb[0].mxu0
  %v265 = vadd.f32 0.0, %v264
  %v266 = vpop.f32.mrb[0].mxu0
  %267 = vmatprep.mubr.bf16.mxu0 0
  %268 = vmatmul.mubr.bf16.gmra.mrb[0].mxu0 %v129
  %v269 = vpop.f32.mrb[0].mxu0
  %v270 = vadd.f32 0.0, %v269
  %v271 = vpop.f32.mrb[0].mxu0
  %v272 = vpop.f32.mrb[0].mxu0
  %v273 = vadd.f32 0.0, %v272
  %v274 = vpop.f32.mrb[0].mxu0
  %275 = vmatprep.mubr.bf16.mxu0 0
  %276 = vmatmul.mubr.bf16.gmra.mrb[0].mxu0 %v130
  %v277 = vpop.f32.mrb[0].mxu0
  %v278 = vadd.f32 0.0, %v277
  %v279 = vpop.f32.mrb[0].mxu0
  %v280 = vpop.f32.mrb[0].mxu0
  %v281 = vadd.f32 0.0, %v280
  %v282 = vpop.f32.mrb[0].mxu0
  %283 = vdwg.mxu0
  %v284 = vadd.f32 %v43, %v222
  %v285 = vadd.f32 %v44, %v225
  %v286 = vadd.f32 %v45, %v230
  %v287 = vadd.f32 %v46, %v233
  %v288 = vadd.f32 %v47, %v238
  %v289 = vadd.f32 %v48, %v241
  %v290 = vadd.f32 %v49, %v246
  %v291 = vadd.f32 %v50, %v249
  %v292 = vadd.f32 %v51, %v254
  %v293 = vadd.f32 %v52, %v257
  %v294 = vadd.f32 %v53, %v262
  %v295 = vadd.f32 %v54, %v265
  %v296 = vadd.f32 %v55, %v270
  %v297 = vadd.f32 %v56, %v273
  %v298 = vadd.f32 %v57, %v278
  %v299 = vadd.f32 %v58, %v281
  %300 = vst [vmem:[#allocation2] sm:$0xff] %v284
  %301 = vst [vmem:[#allocation2 + $0x8] sm:$0xff] %v285
  %302 = vst [vmem:[#allocation2 + $0x10] sm:$0xff] %v286
  %303 = vst [vmem:[#allocation2 + $0x18] sm:$0xff] %v287
  %304 = vst [vmem:[#allocation2 + $0x20] sm:$0xff] %v288
  %305 = vst [vmem:[#allocation2 + $0x28] sm:$0xff] %v289
  %306 = vst [vmem:[#allocation2 + $0x30] sm:$0xff] %v290
  %307 = vst [vmem:[#allocation2 + $0x38] sm:$0xff] %v291
  %308 = vst [vmem:[#allocation2 + $0x40] sm:$0xff] %v292
  %309 = vst [vmem:[#allocation2 + $0x48] sm:$0xff] %v293
  %310 = vst [vmem:[#allocation2 + $0x50] sm:$0xff] %v294
  %311 = vst [vmem:[#allocation2 + $0x58] sm:$0xff] %v295
  %312 = vst [vmem:[#allocation2 + $0x60] sm:$0xff] %v296
  %313 = vst [vmem:[#allocation2 + $0x68] sm:$0xff] %v297
  %314 = vst [vmem:[#allocation2 + $0x70] sm:$0xff] %v298
  %315 = vst [vmem:[#allocation2 + $0x78] sm:$0xff] %v299
  // Predicated region
  $region26: #{stage1_gcn_encoder_forward.2} parent=0 // pred_check
    %p316 = pneg %p23
  $region27: #{stage1_gcn_encoder_forward.2} parent=0 // pred_check_branch
    %318 = sbr.rel (%p316) target = $region29
  $region28: #{stage1_gcn_encoder_forward.2} parent=0 // pred_region
    %v319 = vld [vmem:[%s2] sm:$0xff]
    %v320 = vld [vmem:[%s2 + $0x8] sm:$0xff]
    %v321 = vld [vmem:[%s2 + $0x10] sm:$0xff]
    %v322 = vld [vmem:[%s2 + $0x18] sm:$0xff]
    %v323 = vld [vmem:[%s2 + $0x20] sm:$0xff]
    %v324 = vld [vmem:[%s2 + $0x28] sm:$0xff]
    %v325 = vld [vmem:[%s2 + $0x30] sm:$0xff]
    %v326 = vld [vmem:[%s2 + $0x38] sm:$0xff]
    %v327 = vld [vmem:[%s2 + $0x40] sm:$0xff]
    %v328 = vld [vmem:[%s2 + $0x48] sm:$0xff]
    %v329 = vld [vmem:[%s2 + $0x50] sm:$0xff]
    %v330 = vld [vmem:[%s2 + $0x58] sm:$0xff]
    %v331 = vld [vmem:[%s2 + $0x60] sm:$0xff]
    %v332 = vld [vmem:[%s2 + $0x68] sm:$0xff]
    %v333 = vld [vmem:[%s2 + $0x70] sm:$0xff]
    %v334 = vld [vmem:[%s2 + $0x78] sm:$0xff]
    %v335 = vld [vmem:[#allocation2] sm:$0xff]
    %v336 = vld [vmem:[#allocation2 + $0x8] sm:$0xff]
    %v337 = vld [vmem:[#allocation2 + $0x10] sm:$0xff]
    %v338 = vld [vmem:[#allocation2 + $0x18] sm:$0xff]
    %v339 = vld [vmem:[#allocation2 + $0x20] sm:$0xff]
    %v340 = vld [vmem:[#allocation2 + $0x28] sm:$0xff]
    %v341 = vld [vmem:[#allocation2 + $0x30] sm:$0xff]
    %v342 = vld [vmem:[#allocation2 + $0x38] sm:$0xff]
    %v343 = vld [vmem:[#allocation2 + $0x40] sm:$0xff]
    %v344 = vld [vmem:[#allocation2 + $0x48] sm:$0xff]
    %v345 = vld [vmem:[#allocation2 + $0x50] sm:$0xff]
    %v346 = vld [vmem:[#allocation2 + $0x58] sm:$0xff]
    %v347 = vld [vmem:[#allocation2 + $0x60] sm:$0xff]
    %v348 = vld [vmem:[#allocation2 + $0x68] sm:$0xff]
    %v349 = vld [vmem:[#allocation2 + $0x70] sm:$0xff]
    %v350 = vld [vmem:[#allocation2 + $0x78] sm:$0xff]
    %352 = vset.pattern.permute.xlu0 0
    %353 = vperm.xlu0 %352, %v319
    %v354 = vpop.permute.xlu0 %353
    %357 = vset.pattern.permute.xlu0 0
    %358 = vperm.xlu0 %357, %v320
    %v359 = vpop.permute.xlu0 %358
    %362 = vset.pattern.permute.xlu0 0
    %363 = vperm.xlu0 %362, %v321
    %v364 = vpop.permute.xlu0 %363
    %367 = vset.pattern.permute.xlu0 0
    %368 = vperm.xlu0 %367, %v322
    %v369 = vpop.permute.xlu0 %368
    %372 = vset.pattern.permute.xlu0 0
    %373 = vperm.xlu0 %372, %v323
    %v374 = vpop.permute.xlu0 %373
    %377 = vset.pattern.permute.xlu0 0
    %378 = vperm.xlu0 %377, %v324
    %v379 = vpop.permute.xlu0 %378
    %382 = vset.pattern.permute.xlu0 0
    %383 = vperm.xlu0 %382, %v325
    %v384 = vpop.permute.xlu0 %383
    %387 = vset.pattern.permute.xlu0 0
    %388 = vperm.xlu0 %387, %v326
    %v389 = vpop.permute.xlu0 %388
    %392 = vset.pattern.permute.xlu0 0
    %393 = vperm.xlu0 %392, %v327
    %v394 = vpop.permute.xlu0 %393
    %397 = vset.pattern.permute.xlu0 0
    %398 = vperm.xlu0 %397, %v328
    %v399 = vpop.permute.xlu0 %398
    %402 = vset.pattern.permute.xlu0 0
    %403 = vperm.xlu0 %402, %v329
    %v404 = vpop.permute.xlu0 %403
    %407 = vset.pattern.permute.xlu0 0
    %408 = vperm.xlu0 %407, %v330
    %v409 = vpop.permute.xlu0 %408
    %412 = vset.pattern.permute.xlu0 0
    %413 = vperm.xlu0 %412, %v331
    %v414 = vpop.permute.xlu0 %413
    %417 = vset.pattern.permute.xlu0 0
    %418 = vperm.xlu0 %417, %v332
    %v419 = vpop.permute.xlu0 %418
    %422 = vset.pattern.permute.xlu0 0
    %423 = vperm.xlu0 %422, %v333
    %v424 = vpop.permute.xlu0 %423
    %427 = vset.pattern.permute.xlu0 0
    %428 = vperm.xlu0 %427, %v334
    %v429 = vpop.permute.xlu0 %428
    %v431 = vmul.f32 %v354, %v335
    %v432 = vmul.f32 %v359, %v336
    %v433 = vmul.f32 %v364, %v337
    %v434 = vmul.f32 %v369, %v338
    %v435 = vmul.f32 %v374, %v339
    %v436 = vmul.f32 %v379, %v340
    %v437 = vmul.f32 %v384, %v341
    %v438 = vmul.f32 %v389, %v342
    %v439 = vmul.f32 %v394, %v343
    %v440 = vmul.f32 %v399, %v344
    %v441 = vmul.f32 %v404, %v345
    %v442 = vmul.f32 %v409, %v346
    %v443 = vmul.f32 %v414, %v347
    %v444 = vmul.f32 %v419, %v348
    %v445 = vmul.f32 %v424, %v349
    %v446 = vmul.f32 %v429, %v350
    %v447 = vld [vmem:[%s3] sm:$0x1]
    %v449 = vlaneseq
    %v450 = vshrl.u32 %v449, 7
    %v451 = vsub.s32 0, %v450
    %v452 = vrot.slane %v447, %v451
    %v454 = vadd.f32 %v431, %v452
    %v455 = vadd.f32 %v432, %v452
    %v456 = vadd.f32 %v433, %v452
    %v457 = vadd.f32 %v434, %v452
    %v458 = vadd.f32 %v435, %v452
    %v459 = vadd.f32 %v436, %v452
    %v460 = vadd.f32 %v437, %v452
    %v461 = vadd.f32 %v438, %v452
    %v462 = vadd.f32 %v439, %v452
    %v463 = vadd.f32 %v440, %v452
    %v464 = vadd.f32 %v441, %v452
    %v465 = vadd.f32 %v442, %v452
    %v466 = vadd.f32 %v443, %v452
    %v467 = vadd.f32 %v444, %v452
    %v468 = vadd.f32 %v445, %v452
    %v469 = vadd.f32 %v446, %v452
    %v470 = vtanh.pop %v454
    %v471 = vtanh.pop %v455
    %v472 = vtanh.pop %v456
    %v473 = vtanh.pop %v457
    %v474 = vtanh.pop %v458
    %v475 = vtanh.pop %v459
    %v476 = vtanh.pop %v460
    %v477 = vtanh.pop %v461
    %v478 = vtanh.pop %v462
    %v479 = vtanh.pop %v463
    %v480 = vtanh.pop %v464
    %v481 = vtanh.pop %v465
    %v482 = vtanh.pop %v466
    %v483 = vtanh.pop %v467
    %v484 = vtanh.pop %v468
    %v485 = vtanh.pop %v469
    %486 = vst [vmem:[%s5] sm:$0xff] %v470
    %487 = vst [vmem:[%s5 + $0x8] sm:$0xff] %v471
    %488 = vst [vmem:[%s5 + $0x10] sm:$0xff] %v472
    %489 = vst [vmem:[%s5 + $0x18] sm:$0xff] %v473
    %490 = vst [vmem:[%s5 + $0x20] sm:$0xff] %v474
    %491 = vst [vmem:[%s5 + $0x28] sm:$0xff] %v475
    %492 = vst [vmem:[%s5 + $0x30] sm:$0xff] %v476
    %493 = vst [vmem:[%s5 + $0x38] sm:$0xff] %v477
    %494 = vst [vmem:[%s5 + $0x40] sm:$0xff] %v478
    %495 = vst [vmem:[%s5 + $0x48] sm:$0xff] %v479
    %496 = vst [vmem:[%s5 + $0x50] sm:$0xff] %v480
    %497 = vst [vmem:[%s5 + $0x58] sm:$0xff] %v481
    %498 = vst [vmem:[%s5 + $0x60] sm:$0xff] %v482
    %499 = vst [vmem:[%s5 + $0x68] sm:$0xff] %v483
    %500 = vst [vmem:[%s5 + $0x70] sm:$0xff] %v484
    %501 = vst [vmem:[%s5 + $0x78] sm:$0xff] %v485
    %v502 = vld [vmem:[%s4] sm:$0xff]
    %503 = vmatprep.subr.mxu0 0.0
    %504 = vmatpush1.msra.mxu0 %v470
    %505 = vmatprep.subr.mxu0 0.0
    %506 = vmatpush1.msra.mxu0 %v471
    %507 = vmatprep.subr.mxu0 0.0
    %508 = vmatpush1.msra.mxu0 %v472
    %509 = vmatprep.subr.mxu0 0.0
    %510 = vmatpush1.msra.mxu0 %v473
    %511 = vmatprep.subr.mxu0 0.0
    %512 = vmatpush1.msra.mxu0 %v474
    %513 = vmatprep.subr.mxu0 0.0
    %514 = vmatpush1.msra.mxu0 %v475
    %515 = vmatprep.subr.mxu0 0.0
    %516 = vmatpush1.msra.mxu0 %v476
    %517 = vmatprep.subr.mxu0 0.0
    %518 = vmatpush1.msra.mxu0 %v477
    %519 = vmatprep.subr.mxu0 0.0
    %520 = vmatpush1.msra.mxu0 %v478
    %521 = vmatprep.subr.mxu0 0.0
    %522 = vmatpush1.msra.mxu0 %v479
    %523 = vmatprep.subr.mxu0 0.0
    %524 = vmatpush1.msra.mxu0 %v480
    %525 = vmatprep.subr.mxu0 0.0
    %526 = vmatpush1.msra.mxu0 %v481
    %527 = vmatprep.subr.mxu0 0.0
    %528 = vmatpush1.msra.mxu0 %v482
    %529 = vmatprep.subr.mxu0 0.0
    %530 = vmatpush1.msra.mxu0 %v483
    %531 = vmatprep.subr.mxu0 0.0
    %532 = vmatpush1.msra.mxu0 %v484
    %533 = vmatprep.subr.mxu0 0.0
    %534 = vmatpush1.msra.mxu0 %v485
    %535 = vmatprep.subr.mxu0 0.0
    %536 = vmatpush1.msra.mxu0 0.0
    %537 = vmatprep.subr.mxu0 0.0
    %538 = vmatpush1.msra.mxu0 0.0
    %539 = vmatprep.subr.mxu0 0.0
    %540 = vmatpush1.msra.mxu0 0.0
    %541 = vmatprep.subr.mxu0 0.0
    %542 = vmatpush1.msra.mxu0 0.0
    %543 = vmatprep.subr.mxu0 0.0
    %544 = vmatpush1.msra.mxu0 0.0
    %545 = vmatprep.subr.mxu0 0.0
    %546 = vmatpush1.msra.mxu0 0.0
    %547 = vmatprep.subr.mxu0 0.0
    %548 = vmatpush1.msra.mxu0 0.0
    %549 = vmatprep.subr.mxu0 0.0
    %550 = vmatpush1.msra.mxu0 0.0
    %551 = vmatprep.subr.mxu0 0.0
    %552 = vmatpush1.msra.mxu0 0.0
    %553 = vmatprep.subr.mxu0 0.0
    %554 = vmatpush1.msra.mxu0 0.0
    %555 = vmatprep.subr.mxu0 0.0
    %556 = vmatpush1.msra.mxu0 0.0
    %557 = vmatprep.subr.mxu0 0.0
    %558 = vmatpush1.msra.mxu0 0.0
    %559 = vmatprep.subr.mxu0 0.0
    %560 = vmatpush1.msra.mxu0 0.0
    %561 = vmatprep.subr.mxu0 0.0
    %562 = vmatpush1.msra.mxu0 0.0
    %563 = vmatprep.subr.mxu0 0.0
    %564 = vmatpush1.msra.mxu0 0.0
    %565 = vmatprep.subr.mxu0 0.0
    %566 = vmatpush1.msra.mxu0 0.0
    %567 = vmatprep.mubr.f32.mxu0 0.0
    %568 = vmatmul.mubr.f32.gmra.mrb[0].mxu0 %v502
    %v569 = vpop.f32.mrb[0].mxu0
    %v570 = vadd.f32 0.0, %v569
    %v571 = vpop.f32.mrb[0].mxu0
    %572 = vdwg.mxu0
    %573 = vst [vmem:[%s6] sm:$0xff] %v570
  $region29: #{stage1_gcn_encoder_forward.2} parent=0 // pred_fallthru
    _
  // Predicated region
  $region30: #{stage1_gcn_encoder_forward.2} parent=0 // pred_check
    _
  $region31: #{stage1_gcn_encoder_forward.2} parent=0 // pred_check_branch
    %575 = sbr.rel (0) target = $region33
  $region32: #{stage1_gcn_encoder_forward.2} parent=0 // pred_region
    _
  $region33: #{stage1_gcn_encoder_forward.2} parent=0 // pred_fallthru
    _
  // Predicated region
  $region34: #{stage1_gcn_encoder_forward.2} parent=0 // pred_check
    _
  $region35: #{stage1_gcn_encoder_forward.2} parent=0 // pred_check_branch
    %577 = sbr.rel (0) target = $region37
  $region36: #{stage1_gcn_encoder_forward.2} parent=0 // pred_region
    _
  $region37: #{stage1_gcn_encoder_forward.2} parent=0 // pred_fallthru
    _
  // Predicated region
  $region38: #{stage1_gcn_encoder_forward.2} parent=0 // pred_check
    _
  $region39: #{stage1_gcn_encoder_forward.2} parent=0 // pred_check_branch
    %579 = sbr.rel (0) target = $region41
  $region40: #{stage1_gcn_encoder_forward.2} parent=0 // pred_region
    _
  $region41: #{stage1_gcn_encoder_forward.2} parent=0 // pred_fallthru
    _
  // Predicated region
  $region42: #{stage1_gcn_encoder_forward.2} parent=0 // pred_check
    _
  $region43: #{stage1_gcn_encoder_forward.2} parent=0 // pred_check_branch
    %581 = sbr.rel (0) target = $region45
  $region44: #{stage1_gcn_encoder_forward.2} parent=0 // pred_region
    _
  $region45: #{stage1_gcn_encoder_forward.2} parent=0 // pred_fallthru
    _

</llo_original>
